<compile_context>
chip_gen: v5e
topology: v5e:2x2
jax: 0.10.0
libtpu: 0.0.40
codegen_flags: <defaults>
</compile_context>

<pallas_src>
import functools

import jax
import jax.numpy as jnp
from jax.experimental import pallas as pl
from jax.experimental.pallas import tpu as pltpu


def _mlp_kernel(x_ref, w1_ref, b1_ref, w2_ref, b2_ref, o_ref):
    # x_ref: (TM, F) f32, w1_ref: (F, E), w2_ref: (E, O) in matmul dtype,
    # b1_ref: (1, E) f32, b2_ref: (1, O) f32, o_ref: (TM, O) f32/bf16.
    mm_dtype = w1_ref.dtype
    x = x_ref[...].astype(mm_dtype)                 # in-kernel cast (free under DMA)
    h = jnp.dot(x, w1_ref[...], preferred_element_type=jnp.float32)
    h = jnp.maximum(h + b1_ref[...], 0.0)           # bias + ReLU in f32 on the VPU
    # dropout: identity in eval mode
    y = jnp.dot(h.astype(mm_dtype), w2_ref[...],
                preferred_element_type=jnp.float32)
    o_ref[...] = (y + b2_ref[...]).astype(o_ref.dtype)


def vid2fmri_forward(x, w1, b1, w2, b2, *, block_m=1024,
                     use_bf16_matmul=True, bf16_output=False):
    """x: (B, S, F) float32. Weights pre-transposed: w1 (F, E), w2 (E, O).

    Weights may already be bf16 (recommended: cast once at init time).
    Returns (B, S, O) in float32 (or bfloat16 if bf16_output=True).
    """
    B, S, F = x.shape
    E = w1.shape[1]
    O = w2.shape[1]
    M = B * S

    x2d = x.reshape(M, F)                           # no pad, no wrapper cast

    mm_dtype = jnp.bfloat16 if use_bf16_matmul else jnp.float32
    out_dtype = jnp.bfloat16 if bf16_output else jnp.float32

    # Cast only if needed (no-op when weights are stored in mm_dtype already).
    w1_in = w1 if w1.dtype == mm_dtype else w1.astype(mm_dtype)
    w2_in = w2 if w2.dtype == mm_dtype else w2.astype(mm_dtype)
    b1_2d = b1.reshape(1, E).astype(jnp.float32)
    b2_2d = b2.reshape(1, O).astype(jnp.float32)

    # Row tile: whole problem in one block when small, else a multiple of 8
    # (sublane) so every non-final block satisfies the (8, 128) constraint.
    if M <= block_m:
        tm = M
    else:
        tm = max(8, (block_m // 8) * 8)
    grid_m = pl.cdiv(M, tm)

    w_item = jnp.dtype(mm_dtype).itemsize
    out_item = jnp.dtype(out_dtype).itemsize
    flops = 2 * M * F * E + 2 * M * E * O
    bytes_accessed = (
        M * F * 4                                   # x (f32 in)
        + F * E * w_item + E * 4                    # w1, b1
        + E * O * w_item + O * 4                    # w2, b2
        + M * O * out_item                          # out
    )

    out2d = pl.pallas_call(
        _mlp_kernel,
        out_shape=jax.ShapeDtypeStruct((M, O), out_dtype),
        grid=(grid_m,),
        in_specs=[
            pl.BlockSpec((tm, F), lambda i: (i, 0)),   # x tile, pipelined
            pl.BlockSpec((F, E), lambda i: (0, 0)),    # w1, VMEM-resident
            pl.BlockSpec((1, E), lambda i: (0, 0)),    # b1
            pl.BlockSpec((E, O), lambda i: (0, 0)),    # w2, VMEM-resident
            pl.BlockSpec((1, O), lambda i: (0, 0)),    # b2
        ],
        out_specs=pl.BlockSpec((tm, O), lambda i: (i, 0)),
        compiler_params=pltpu.CompilerParams(
            # Single row axis: megacore sharding on multi-TC chips (v7x).
            # TODO(synk): if an xprof trace shows one v7x TC idle, switch to
            #             pltpu.CORE_PARALLEL or add an explicit core axis.
            dimension_semantics=("parallel",),
            vmem_limit_bytes=48 * 1024 * 1024,         # headroom under v7x 64 MiB
        ),
        cost_estimate=pl.CostEstimate(
            flops=flops, transcendentals=0, bytes_accessed=bytes_accessed),
    )(x2d, w1_in, b1_2d, w2_in, b2_2d)

    return out2d.reshape(B, S, O)


def init_params(key, num_of_features, embed_size, output_size):
    """Deterministic init matching nn.Linear's U(-1/sqrt(fan_in), 1/sqrt(fan_in)).

    Weights returned pre-transposed: w1 (F, E), w2 (E, O), in float32.
    """
    k1, k2, k3, k4 = jax.random.split(key, 4)
    lim1 = 1.0 / jnp.sqrt(jnp.float32(num_of_features))
    lim2 = 1.0 / jnp.sqrt(jnp.float32(embed_size))
    w1 = jax.random.uniform(k1, (num_of_features, embed_size),
                            jnp.float32, -lim1, lim1)
    b1 = jax.random.uniform(k2, (embed_size,), jnp.float32, -lim1, lim1)
    w2 = jax.random.uniform(k3, (embed_size, output_size),
                            jnp.float32, -lim2, lim2)
    b2 = jax.random.uniform(k4, (output_size,), jnp.float32, -lim2, lim2)
    return w1, b1, w2, b2


if __name__ == "__main__":
    # Shapes consistent with the module's forward:
    #   num_of_features = 128, embed_size = 128, output_size = 256
    #   input: (batch=2, seq=8, num_of_features=128)
    B, S, F, E, O = 2, 8, 128, 128, 256

    key = jax.random.PRNGKey(0)
    kx, kp = jax.random.split(key)
    x = jax.random.normal(kx, (B, S, F), jnp.float32)
    w1, b1, w2, b2 = init_params(kp, F, E, O)

    # Cast weights to bf16 once, outside jit (no per-call cast traffic).
    bf = jnp.bfloat16
    w1_bf = w1.astype(bf)
    w2_bf = w2.astype(bf)

    fwd = jax.jit(functools.partial(vid2fmri_forward, block_m=1024,
                                    use_bf16_matmul=True, bf16_output=False))
    out = jax.block_until_ready(fwd(x, w1_bf, b1, w2_bf, b2))
    assert out.shape == (B, S, O)
    assert out.dtype == jnp.float32

    # Reference with matching bf16-operand / f32-accumulate matmuls (tight check).
    ref_h = jnp.maximum(
        jnp.dot(x.reshape(B * S, F).astype(bf), w1_bf,
                preferred_element_type=jnp.float32) + b1, 0.0)
    ref = (jnp.dot(ref_h.astype(bf), w2_bf,
                   preferred_element_type=jnp.float32) + b2).reshape(B, S, O)
    assert jnp.allclose(out, ref, atol=2e-3, rtol=2e-3)

    # Loose sanity check against the exact f32 PyTorch-equivalent forward.
    ref_f32 = jnp.maximum(x @ w1 + b1, 0.0) @ w2 + b2
    assert jnp.allclose(out, ref_f32, atol=5e-2, rtol=5e-2)

    # Exercise the multi-block path with a partial last tile (no padding copy):
    # M = 4*300 = 1200 rows, block_m=512 -> grid of 3, last block masked.
    B2, S2 = 4, 300
    x_big = jax.random.normal(jax.random.PRNGKey(1), (B2, S2, F), jnp.float32)
    fwd_big = jax.jit(functools.partial(vid2fmri_forward, block_m=512,
                                        use_bf16_matmul=True, bf16_output=False))
    out_big = jax.block_until_ready(fwd_big(x_big, w1_bf, b1, w2_bf, b2))
    ref_h_big = jnp.maximum(
        jnp.dot(x_big.reshape(B2 * S2, F).astype(bf), w1_bf,
                preferred_element_type=jnp.float32) + b1, 0.0)
    ref_big = (jnp.dot(ref_h_big.astype(bf), w2_bf,
                       preferred_element_type=jnp.float32) + b2).reshape(B2, S2, O)
    assert jnp.allclose(out_big, ref_big, atol=2e-3, rtol=2e-3)

    print("KERNEL_OK")
</pallas_src>

<mosaic_0001>
module attributes {stable_mosaic.version = 11 : i64} {
  func.func @_mlp_kernel(%arg0: i32, %arg1: memref<16x128xf32, #tpu.memory_space<vmem>>, %arg2: memref<128x128xbf16, #tpu.memory_space<vmem>>, %arg3: memref<1x128xf32, #tpu.memory_space<vmem>>, %arg4: memref<128x256xbf16, #tpu.memory_space<vmem>>, %arg5: memref<1x256xf32, #tpu.memory_space<vmem>>, %arg6: memref<16x256xf32, #tpu.memory_space<vmem>>) attributes {dimension_semantics = [#tpu.dimension_semantics<parallel>], iteration_bounds = array<i64: 1>, scalar_prefetch = 0 : i64, scratch_operands = 0 : i64, tpu.core_type = #tpu.core_type<tc>, window_params = [{transform_indices = @transform_0, window_bounds = array<i64: 16, 128>}, {pipeline_mode = #tpu.pipeline_mode<synchronous>, transform_indices = @transform_1, window_bounds = array<i64: 128, 128>}, {pipeline_mode = #tpu.pipeline_mode<synchronous>, transform_indices = @transform_2, window_bounds = array<i64: 1, 128>}, {pipeline_mode = #tpu.pipeline_mode<synchronous>, transform_indices = @transform_3, window_bounds = array<i64: 128, 256>}, {pipeline_mode = #tpu.pipeline_mode<synchronous>, transform_indices = @transform_4, window_bounds = array<i64: 1, 256>}, {transform_indices = @transform_5, window_bounds = array<i64: 16, 256>}]} {
    %c0 = arith.constant 0 : index
    %c0_0 = arith.constant 0 : index
    %0 = vector.load %arg1[%c0, %c0_0] : memref<16x128xf32, #tpu.memory_space<vmem>>, vector<16x128xf32>
    %1 = arith.truncf %0 : vector<16x128xf32> to vector<16x128xbf16>
    %c0_1 = arith.constant 0 : index
    %c0_2 = arith.constant 0 : index
    %2 = vector.load %arg2[%c0_1, %c0_2] : memref<128x128xbf16, #tpu.memory_space<vmem>>, vector<128x128xbf16>
    %cst = arith.constant dense<0.000000e+00> : vector<16x128xf32>
    %3 = tpu.matmul %1, %2, %cst {dimension_numbers = #tpu.dot_dimension_numbers<[1], [0], [0], [1], [0, 0, 1, 1], [], []>} : vector<16x128xbf16>, vector<128x128xbf16>, vector<16x128xf32> -> vector<16x128xf32>
    %c0_3 = arith.constant 0 : index
    %c0_4 = arith.constant 0 : index
    %4 = vector.load %arg3[%c0_3, %c0_4] : memref<1x128xf32, #tpu.memory_space<vmem>>, vector<1x128xf32>
    %5 = vector.broadcast %4 : vector<1x128xf32> to vector<16x128xf32>
    %6 = arith.addf %3, %5 : vector<16x128xf32>
    %cst_5 = arith.constant 0.000000e+00 : f32
    %7 = vector.broadcast %cst_5 : f32 to vector<16x128xf32>
    %8 = arith.maximumf %6, %7 : vector<16x128xf32>
    %9 = arith.truncf %8 : vector<16x128xf32> to vector<16x128xbf16>
    %c0_6 = arith.constant 0 : index
    %c0_7 = arith.constant 0 : index
    %10 = vector.load %arg4[%c0_6, %c0_7] : memref<128x256xbf16, #tpu.memory_space<vmem>>, vector<128x256xbf16>
    %cst_8 = arith.constant dense<0.000000e+00> : vector<16x256xf32>
    %11 = tpu.matmul %9, %10, %cst_8 {dimension_numbers = #tpu.dot_dimension_numbers<[1], [0], [0], [1], [0, 0, 1, 1], [], []>} : vector<16x128xbf16>, vector<128x256xbf16>, vector<16x256xf32> -> vector<16x256xf32>
    %c0_9 = arith.constant 0 : index
    %c0_10 = arith.constant 0 : index
    %12 = vector.load %arg5[%c0_9, %c0_10] : memref<1x256xf32, #tpu.memory_space<vmem>>, vector<1x256xf32>
    %13 = vector.broadcast %12 : vector<1x256xf32> to vector<16x256xf32>
    %14 = arith.addf %11, %13 : vector<16x256xf32>
    %c0_11 = arith.constant 0 : index
    %c0_12 = arith.constant 0 : index
    %15 = vector.load %arg6[%c0_11, %c0_12] : memref<16x256xf32, #tpu.memory_space<vmem>>, vector<16x256xf32>
    tpu.vector_store %arg6[%c0_11, %c0_12], %14 {strides = array<i32>} : memref<16x256xf32, #tpu.memory_space<vmem>>, vector<16x256xf32>,
    return
  }
  func.func @transform_0(%arg0: i32) -> (i32, i32) {
    %c0_i32 = arith.constant 0 : i32
    %c0_i32_0 = arith.constant 0 : i32
    return %arg0, %c0_i32 : i32, i32
  }
  func.func @transform_1(%arg0: i32) -> (i32, i32) {
    %c0_i32 = arith.constant 0 : i32
    %c0_i32_0 = arith.constant 0 : i32
    %c0_i32_1 = arith.constant 0 : i32
    return %c0_i32, %c0_i32_0 : i32, i32
  }
  func.func @transform_2(%arg0: i32) -> (i32, i32) {
    %c0_i32 = arith.constant 0 : i32
    %c0_i32_0 = arith.constant 0 : i32
    %c0_i32_1 = arith.constant 0 : i32
    return %c0_i32, %c0_i32_0 : i32, i32
  }
  func.func @transform_3(%arg0: i32) -> (i32, i32) {
    %c0_i32 = arith.constant 0 : i32
    %c0_i32_0 = arith.constant 0 : i32
    %c0_i32_1 = arith.constant 0 : i32
    return %c0_i32, %c0_i32_0 : i32, i32
  }
  func.func @transform_4(%arg0: i32) -> (i32, i32) {
    %c0_i32 = arith.constant 0 : i32
    %c0_i32_0 = arith.constant 0 : i32
    %c0_i32_1 = arith.constant 0 : i32
    return %c0_i32, %c0_i32_0 : i32, i32
  }
  func.func @transform_5(%arg0: i32) -> (i32, i32) {
    %c0_i32 = arith.constant 0 : i32
    %c0_i32_0 = arith.constant 0 : i32
    return %arg0, %c0_i32 : i32, i32
  }
}

</mosaic_0001>

<llo_original>
// kernel: vid2fmri_forward.1
$region0: #{vid2fmri_forward.1}
  #allocation0 [shape = 'u32[]', space=smem, size = 0x4, offset = 0x4, fixed_abs, tag = 'smem constant byte address 0x4 - core index']
  #allocation1 [shape = 'u32[72,128]{1,0:T(1,128)}', space=vmem, size = 0x9000, scoped, tag = 'internal scratch']
  %s0 = inlined_call_operand.hbm [shape: f32[16,128], index: 0, kind: input, shape index: {}]
  %s1 = inlined_call_operand.hbm [shape: bf16[128,128], index: 1, kind: input, shape index: {}]
  %s2 = inlined_call_operand.vmem [shape: f32[1,128], index: 2, kind: input, shape index: {}]
  %s3 = inlined_call_operand.hbm [shape: bf16[128,256], index: 3, kind: input, shape index: {}]
  %s4 = inlined_call_operand.vmem [shape: f32[1,256], index: 4, kind: input, shape index: {}]
  %s5 = inlined_call_operand.hbm [shape: f32[16,256], index: 5, kind: output, shape index: {}]
  %s6 = sld [smem:[#allocation0]]
  $region42: #{vid2fmri_forward.1} parent=0
    _
  %s8 = ssub.s32 1, %s6
  %s9 = scalar_select 0, %s8, %s6
  $region1: #{vid2fmri_forward.1} parent=0
    #allocation2 [shape = 'u8[8192]{0}', space=vmem, size = 0x2000, scoped, tag = 'input window, operand 0, single buffered']
    #allocation3 [shape = 's32[1]{0}', space=sflag, size = 0x4, scoped, tag = 'scoped memory for vid2fmri_forward.1']
    #allocation4 [shape = 's32[1]{0}', space=sflag, size = 0x4, scoped, tag = 'scoped memory for vid2fmri_forward.1']
    #allocation5 [shape = 'u8[32768]{0}', space=vmem, size = 0x8000, scoped, tag = 'input window, operand 1, single buffered']
    #allocation6 [shape = 's32[1]{0}', space=sflag, size = 0x4, scoped, tag = 'scoped memory for vid2fmri_forward.1']
    #allocation7 [shape = 'u8[65536]{0}', space=vmem, size = 0x10000, scoped, tag = 'input window, operand 3, single buffered']
    #allocation8 [shape = 'u8[16384]{0}', space=vmem, size = 0x4000, scoped, tag = 'output window, operand 0, single buffered']
    %10 = vsyncpa [#allocation3], 0
    %11 = vsyncpa [#allocation6], 0
    %12 = vsyncpa [#allocation4], 0
    // Predicated region
    $region2: #{vid2fmri_forward.1} parent=1 // pred_check
      _
    $region3: #{vid2fmri_forward.1} parent=1 // pred_check_branch
      %14 = sbr.rel (0) target = $region5
    $region4: #{vid2fmri_forward.1} parent=1 // pred_region
      %16 = vsyncadd [#allocation3], 0
      %s17 = sshll.u32 %s0, 4
      %s18 = int_to_ptr.hbm [resolvable:$true] %s17
      %s19 = sshll.u32 [#allocation2], 4
      %s20 = int_to_ptr.vmem [resolvable:$true] %s19
      %25 = dma.hbm_to_vmem [thread:$0]  %s18, 256, %s20, [#allocation3], 128, 128, 8
    $region5: #{vid2fmri_forward.1} parent=1 // pred_fallthru
      _
    // Predicated region
    $region6: #{vid2fmri_forward.1} parent=1 // pred_check
      _
    $region7: #{vid2fmri_forward.1} parent=1 // pred_check_branch
      %27 = sbr.rel (0) target = $region9
    $region8: #{vid2fmri_forward.1} parent=1 // pred_region
      %29 = vsyncadd [#allocation6], 0
      %s30 = sshll.u32 %s1, 4
      %s31 = int_to_ptr.hbm [resolvable:$true] %s30
      %s32 = sshll.u32 [#allocation5], 4
      %s33 = int_to_ptr.vmem [resolvable:$true] %s32
      %38 = dma.hbm_to_vmem [thread:$0]  %s31, 1024, %s33, [#allocation6], 64, 64, 4
    $region9: #{vid2fmri_forward.1} parent=1 // pred_fallthru
      _
    // Predicated region
    $region10: #{vid2fmri_forward.1} parent=1 // pred_check
      _
    $region11: #{vid2fmri_forward.1} parent=1 // pred_check_branch
      %40 = sbr.rel (0) target = $region13
    $region12: #{vid2fmri_forward.1} parent=1 // pred_region
      _
    $region13: #{vid2fmri_forward.1} parent=1 // pred_fallthru
      _
    // Predicated region
    $region14: #{vid2fmri_forward.1} parent=1 // pred_check
      _
    $region15: #{vid2fmri_forward.1} parent=1 // pred_check_branch
      %42 = sbr.rel (0) target = $region17
    $region16: #{vid2fmri_forward.1} parent=1 // pred_region
      %44 = vsyncadd [#allocation6], 0
      %s45 = sshll.u32 %s3, 4
      %s46 = int_to_ptr.hbm [resolvable:$true] %s45
      %s47 = sshll.u32 [#allocation7], 4
      %s48 = int_to_ptr.vmem [resolvable:$true] %s47
      %53 = dma.hbm_to_vmem [thread:$0]  %s46, 2048, %s48, [#allocation6], 128, 128, 8
    $region17: #{vid2fmri_forward.1} parent=1 // pred_fallthru
      _
    // Predicated region
    $region18: #{vid2fmri_forward.1} parent=1 // pred_check
      _
    $region19: #{vid2fmri_forward.1} parent=1 // pred_check_branch
      %55 = sbr.rel (0) target = $region21
    $region20: #{vid2fmri_forward.1} parent=1 // pred_region
      _
    $region21: #{vid2fmri_forward.1} parent=1 // pred_fallthru
      _
    // Predicated region
    $region22: #{vid2fmri_forward.1} parent=1 // pred_check
      _
    $region23: #{vid2fmri_forward.1} parent=1 // pred_check_branch
      %57 = sbr.rel (0) target = $region25
    $region24: #{vid2fmri_forward.1} parent=1 // pred_region
      %59 = dma.done [#allocation3], 256
    $region25: #{vid2fmri_forward.1} parent=1 // pred_fallthru
      _
    // Predicated region
    $region26: #{vid2fmri_forward.1} parent=1 // pred_check
      _
    $region27: #{vid2fmri_forward.1} parent=1 // pred_check_branch
      %61 = sbr.rel (0) target = $region29
    $region28: #{vid2fmri_forward.1} parent=1 // pred_region
      %63 = dma.done [#allocation6], 1024
    $region29: #{vid2fmri_forward.1} parent=1 // pred_fallthru
      _
    // Predicated region
    $region30: #{vid2fmri_forward.1} parent=1 // pred_check
      _
    $region31: #{vid2fmri_forward.1} parent=1 // pred_check_branch
      %65 = sbr.rel (0) target = $region33
    $region32: #{vid2fmri_forward.1} parent=1 // pred_region
      %67 = dma.done [#allocation6], 2048
    $region33: #{vid2fmri_forward.1} parent=1 // pred_fallthru
      _
    %v68 = vld [vmem:[#allocation2] sm:$0xff]
    %v69 = vld [vmem:[#allocation2 + $0x8] sm:$0xff]
    %v70 = vpack.c.bf16 %v69, %v68
    %v71 = vld [vmem:[#allocation5] sm:$0xf]
    %v72 = vld [vmem:[#allocation5 + $0x4] sm:$0xf]
    %v73 = vld [vmem:[#allocation5 + $0x8] sm:$0xf]
    %v74 = vld [vmem:[#allocation5 + $0xc] sm:$0xf]
    %v75 = vld [vmem:[#allocation5 + $0x10] sm:$0xf]
    %v76 = vld [vmem:[#allocation5 + $0x14] sm:$0xf]
    %v77 = vld [vmem:[#allocation5 + $0x18] sm:$0xf]
    %v78 = vld [vmem:[#allocation5 + $0x1c] sm:$0xf]
    %v79 = vld [vmem:[#allocation5 + $0x20] sm:$0xf]
    %v80 = vld [vmem:[#allocation5 + $0x24] sm:$0xf]
    %v81 = vld [vmem:[#allocation5 + $0x28] sm:$0xf]
    %v82 = vld [vmem:[#allocation5 + $0x2c] sm:$0xf]
    %v83 = vld [vmem:[#allocation5 + $0x30] sm:$0xf]
    %v84 = vld [vmem:[#allocation5 + $0x34] sm:$0xf]
    %v85 = vld [vmem:[#allocation5 + $0x38] sm:$0xf]
    %v86 = vld [vmem:[#allocation5 + $0x3c] sm:$0xf]
    %v87 = vld [vmem:[%s2] sm:$0x1]
    %v89 = vperm.slane %v87, 0
    %v107 = vunpack.c.l.b16 %v71
    %v108 = vunpack.c.l.b16 %v72
    %v109 = vunpack.c.l.b16 %v73
    %v110 = vunpack.c.l.b16 %v74
    %v111 = vunpack.c.l.b16 %v75
    %v112 = vunpack.c.l.b16 %v76
    %v113 = vunpack.c.l.b16 %v77
    %v114 = vunpack.c.l.b16 %v78
    %v115 = vunpack.c.l.b16 %v79
    %v116 = vunpack.c.l.b16 %v80
    %v117 = vunpack.c.l.b16 %v81
    %v118 = vunpack.c.l.b16 %v82
    %v119 = vunpack.c.l.b16 %v83
    %v120 = vunpack.c.l.b16 %v84
    %v121 = vunpack.c.l.b16 %v85
    %v122 = vunpack.c.l.b16 %v86
    %v123 = vpack.c.b16 %v108, %v107
    %v124 = vpack.c.b16 %v110, %v109
    %v125 = vpack.c.b16 %v112, %v111
    %v126 = vpack.c.b16 %v114, %v113
    %v127 = vpack.c.b16 %v116, %v115
    %v128 = vpack.c.b16 %v118, %v117
    %v129 = vpack.c.b16 %v120, %v119
    %v130 = vpack.c.b16 %v122, %v121
    %139 = vmatpush.bf16.msra.mxu0 %v130
    %140 = vmatpush.bf16.msra.mxu0 %v129
    %141 = vmatpush.bf16.msra.mxu0 %v128
    %142 = vmatpush.bf16.msra.mxu0 %v127
    %143 = vmatpush.bf16.msra.mxu0 %v126
    %144 = vmatpush.bf16.msra.mxu0 %v125
    %145 = vmatpush.bf16.msra.mxu0 %v124
    %146 = vmatpush.bf16.msra.mxu0 %v123
    %147 = vmatmul.bf16.gmra.mxu0 %v70
    %v148 = vpop.f32.mrf.mxu0
    %v149 = vadd.f32 %v89, %v148
    %v150 = vpop.f32.mrf.mxu0
    %v151 = vadd.f32 %v89, %v150
    %152 = vdwg.mxu0
    %v153 = vmax.f32 %v149, 0.0
    %v154 = vmax.f32 %v151, 0.0
    %v155 = vpack.c.bf16 %v154, %v153
    %v156 = vld [vmem:[#allocation7] sm:$0xff]
    %v157 = vld [vmem:[#allocation7 + $0x8] sm:$0xff]
    %v158 = vld [vmem:[#allocation7 + $0x10] sm:$0xff]
    %v159 = vld [vmem:[#allocation7 + $0x18] sm:$0xff]
    %v160 = vld [vmem:[#allocation7 + $0x20] sm:$0xff]
    %v161 = vld [vmem:[#allocation7 + $0x28] sm:$0xff]
    %v162 = vld [vmem:[#allocation7 + $0x30] sm:$0xff]
    %v163 = vld [vmem:[#allocation7 + $0x38] sm:$0xff]
    %v164 = vld [vmem:[#allocation7 + $0x40] sm:$0xff]
    %v165 = vld [vmem:[#allocation7 + $0x48] sm:$0xff]
    %v166 = vld [vmem:[#allocation7 + $0x50] sm:$0xff]
    %v167 = vld [vmem:[#allocation7 + $0x58] sm:$0xff]
    %v168 = vld [vmem:[#allocation7 + $0x60] sm:$0xff]
    %v169 = vld [vmem:[#allocation7 + $0x68] sm:$0xff]
    %v170 = vld [vmem:[#allocation7 + $0x70] sm:$0xff]
    %v171 = vld [vmem:[#allocation7 + $0x78] sm:$0xff]
    %v172 = vld [vmem:[%s4] sm:$0x3]
    %v174 = vperm.slane %v172, 0
    %v175 = vperm.slane %v172, 1
    %v194 = vunpack.c.l.b16 %v156
    %v195 = vunpack.c.h.b16 %v156
    %v196 = vunpack.c.l.b16 %v157
    %v197 = vunpack.c.h.b16 %v157
    %v198 = vunpack.c.l.b16 %v158
    %v199 = vunpack.c.h.b16 %v158
    %v200 = vunpack.c.l.b16 %v159
    %v201 = vunpack.c.h.b16 %v159
    %v202 = vunpack.c.l.b16 %v160
    %v203 = vunpack.c.h.b16 %v160
    %v204 = vunpack.c.l.b16 %v161
    %v205 = vunpack.c.h.b16 %v161
    %v206 = vunpack.c.l.b16 %v162
    %v207 = vunpack.c.h.b16 %v162
    %v208 = vunpack.c.l.b16 %v163
    %v209 = vunpack.c.h.b16 %v163
    %v210 = vunpack.c.l.b16 %v164
    %v211 = vunpack.c.h.b16 %v164
    %v212 = vunpack.c.l.b16 %v165
    %v213 = vunpack.c.h.b16 %v165
    %v214 = vunpack.c.l.b16 %v166
    %v215 = vunpack.c.h.b16 %v166
    %v216 = vunpack.c.l.b16 %v167
    %v217 = vunpack.c.h.b16 %v167
    %v218 = vunpack.c.l.b16 %v168
    %v219 = vunpack.c.h.b16 %v168
    %v220 = vunpack.c.l.b16 %v169
    %v221 = vunpack.c.h.b16 %v169
    %v222 = vunpack.c.l.b16 %v170
    %v223 = vunpack.c.h.b16 %v170
    %v224 = vunpack.c.l.b16 %v171
    %v225 = vunpack.c.h.b16 %v171
    %v226 = vpack.c.b16 %v196, %v194
    %v227 = vpack.c.b16 %v197, %v195
    %v228 = vpack.c.b16 %v200, %v198
    %v229 = vpack.c.b16 %v201, %v199
    %v230 = vpack.c.b16 %v204, %v202
    %v231 = vpack.c.b16 %v205, %v203
    %v232 = vpack.c.b16 %v208, %v206
    %v233 = vpack.c.b16 %v209, %v207
    %v234 = vpack.c.b16 %v212, %v210
    %v235 = vpack.c.b16 %v213, %v211
    %v236 = vpack.c.b16 %v216, %v214
    %v237 = vpack.c.b16 %v217, %v215
    %v238 = vpack.c.b16 %v220, %v218
    %v239 = vpack.c.b16 %v221, %v219
    %v240 = vpack.c.b16 %v224, %v222
    %v241 = vpack.c.b16 %v225, %v223
    %258 = vmatpush.bf16.msra.mxu0 %v240
    %259 = vmatpush.bf16.msra.mxu0 %v238
    %260 = vmatpush.bf16.msra.mxu0 %v236
    %261 = vmatpush.bf16.msra.mxu0 %v234
    %262 = vmatpush.bf16.msra.mxu0 %v232
    %263 = vmatpush.bf16.msra.mxu0 %v230
    %264 = vmatpush.bf16.msra.mxu0 %v228
    %265 = vmatpush.bf16.msra.mxu0 %v226
    %266 = vmatmul.bf16.gmra.mxu0 %v155
    %v267 = vpop.f32.mrf.mxu0
    %v268 = vadd.f32 %v174, %v267
    %v269 = vpop.f32.mrf.mxu0
    %v270 = vadd.f32 %v174, %v269
    %271 = vdwg.mxu0
    %272 = vmatpush.bf16.msra.mxu0 %v241
    %273 = vmatpush.bf16.msra.mxu0 %v239
    %274 = vmatpush.bf16.msra.mxu0 %v237
    %275 = vmatpush.bf16.msra.mxu0 %v235
    %276 = vmatpush.bf16.msra.mxu0 %v233
    %277 = vmatpush.bf16.msra.mxu0 %v231
    %278 = vmatpush.bf16.msra.mxu0 %v229
    %279 = vmatpush.bf16.msra.mxu0 %v227
    %280 = vmatmul.bf16.gmra.mxu0 %v155
    %v281 = vpop.f32.mrf.mxu0
    %v282 = vadd.f32 %v175, %v281
    %v283 = vpop.f32.mrf.mxu0
    %v284 = vadd.f32 %v175, %v283
    %285 = vdwg.mxu0
    %286 = vst [vmem:[#allocation8] sm:$0xff] %v268
    %287 = vst [vmem:[#allocation8 + $0x8] sm:$0xff] %v282
    %288 = vst [vmem:[#allocation8 + $0x10] sm:$0xff] %v270
    %289 = vst [vmem:[#allocation8 + $0x18] sm:$0xff] %v284
    // Predicated region
    $region34: #{vid2fmri_forward.1} parent=1 // pred_check
      _
    $region35: #{vid2fmri_forward.1} parent=1 // pred_check_branch
      %291 = sbr.rel (0) target = $region37
    $region36: #{vid2fmri_forward.1} parent=1 // pred_region
      %293 = vsyncadd [#allocation4], 0
      %s294 = sshll.u32 [#allocation8], 4
      %s295 = int_to_ptr.vmem [resolvable:$true] %s294
      %s296 = sshll.u32 %s5, 4
      %s297 = int_to_ptr.hbm [resolvable:$true] %s296
      %302 = dma.vmem_to_hbm [thread:$0]  %s295, 512, %s297, [#allocation4], 256, 256, 16
    $region37: #{vid2fmri_forward.1} parent=1 // pred_fallthru
      _
    // Predicated region
    $region38: #{vid2fmri_forward.1} parent=1 // pred_check
      _
    $region39: #{vid2fmri_forward.1} parent=1 // pred_check_branch
      %304 = sbr.rel (0) target = $region41
    $region40: #{vid2fmri_forward.1} parent=1 // pred_region
      %306 = dma.done [#allocation4], 512
    $region41: #{vid2fmri_forward.1} parent=1 // pred_fallthru
      _
    %307 = vsyncpa [#allocation3], 1
    %308 = vsyncpa [#allocation6], 1
    %309 = vsyncpa [#allocation4], 1

</llo_original>
